<compile_context>
chip_gen: v6e
topology: v6e:2x2x1
jax: 0.10.0
libtpu: 0.0.40
codegen_flags: <defaults>
</compile_context>

<pallas_src>
import jax
import jax.numpy as jnp
from jax.experimental import pallas as pl
from jax.experimental.pallas import tpu as pltpu


def simple_nn_kernel(x_ref, w1_ref, b1_ref, w2_ref, b2_ref, o_ref):
    # fc1 on the MXU: (TM, D) @ (D, H), f32 accumulation regardless of input dtype.
    h = jnp.dot(x_ref[...], w1_ref[...], preferred_element_type=jnp.float32)
    h = h + b1_ref[...]                 # (TM, H) + (1, H) broadcast
    h = jnp.maximum(h, 0.0)             # ReLU on the VPU (f32)

    # fc2 (out_features=1) as a VPU multiply + XLU lane reduction: an N=1 MXU
    # matmul would fill 1/128 output columns and still pay full push/drain
    # latency; the XLU slot is otherwise idle here, so this is essentially free.
    z = jnp.sum(h * w2_ref[...], axis=-1, keepdims=True)   # (TM, 1)
    z = z + b2_ref[0, 0]                # scalar bias read from SMEM

    # Sigmoid in f32 (EUP exp + reciprocal), stored lane-dense as (1, TM).
    o_ref[...] = jax.nn.sigmoid(z).reshape(o_ref.shape)


def prepare_params(w1, b1, w2, b2, *, matmul_dtype=jnp.bfloat16):
    """One-time weight prep, hoisted out of the per-call forward.

    w1 is cast to the matmul streaming dtype (bf16 by default — all MXU
    generations take bf16 natively and the kernel is HBM-bound; pass
    matmul_dtype=jnp.float32 for bit-exact f32 numerics).  b1 / w2 / b2 stay
    f32: they feed the f32 VPU/EUP epilogue.
    """
    H = w1.shape[1]
    if matmul_dtype is None:
        matmul_dtype = jnp.float32
    w1 = w1.astype(matmul_dtype)
    b1 = b1.reshape(1, H).astype(jnp.float32)
    w2 = w2.reshape(1, H).astype(jnp.float32)
    b2 = b2.reshape(1, 1).astype(jnp.float32)
    return w1, b1, w2, b2


def simple_nn_forward(x, params, *, tile_m=256):
    """Forward pass of SimpleNN: sigmoid(relu(x @ W1 + b1) @ W2.T + b2).

    x: (B, D); params: output of prepare_params().  Returns (B, 1) f32.
    For maximum bandwidth, supply x already in the matmul dtype (bf16 by
    default) so no per-call cast pass over the activation is needed.
    """
    w1, b1, w2, b2 = params
    B, D = x.shape
    H = w1.shape[1]

    # Only the activation is touched per call (weights were prepped once).
    if x.dtype != w1.dtype:
        x = x.astype(w1.dtype)

    itemsize = jnp.dtype(x.dtype).itemsize
    cost = pl.CostEstimate(
        flops=2 * B * D * H + 3 * B * H,
        transcendentals=2 * B,                                   # exp + recip per output
        bytes_accessed=itemsize * (B * D + D * H) + 4 * (2 * H + 1 + B),
    )

    smem = pltpu.MemorySpace.SMEM
    vmem = pltpu.MemorySpace.VMEM
    out_shape = jax.ShapeDtypeStruct((1, B), jnp.float32)        # lane-dense output

    if B > tile_m:
        # Gridded batched-inference path.  cdiv grid + block masking handles
        # ragged batches; weights map to the same block every step (DMA'd once,
        # VMEM-resident); the batch axis is "parallel" so a multi-TensorCore
        # chip can shard it.
        grid_m = pl.cdiv(B, tile_m)

        # Explicit scoped-VMEM budget when the double-buffered working set
        # exceeds the smallest default limit (v5e: 16 MiB).
        x_tile_bytes = tile_m * D * itemsize
        w1_bytes = D * H * jnp.dtype(w1.dtype).itemsize
        needed = 2 * (x_tile_bytes + w1_bytes + tile_m * 4 + 2 * H * 4) + (2 << 20)
        vmem_limit = needed if needed > (16 << 20) else None

        out = pl.pallas_call(
            simple_nn_kernel,
            out_shape=out_shape,
            grid=(grid_m,),
            in_specs=[
                pl.BlockSpec((tile_m, D), lambda i: (i, 0)),     # x tile, full D (no padding)
                pl.BlockSpec((D, H), lambda i: (0, 0)),          # w1 resident
                pl.BlockSpec((1, H), lambda i: (0, 0)),          # b1 resident
                pl.BlockSpec((1, H), lambda i: (0, 0)),          # w2 resident
                pl.BlockSpec(memory_space=smem),                 # b2 scalar
            ],
            out_specs=pl.BlockSpec((1, tile_m), lambda i: (0, i)),
            compiler_params=pltpu.CompilerParams(
                dimension_semantics=("parallel",),
                vmem_limit_bytes=vmem_limit,
            ),
            cost_estimate=cost,
        )(x, w1, b1, w2, b2)
    else:
        # Small-batch path: whole arrays as single VMEM blocks, one invocation,
        # zero per-step pipeline overhead.
        out = pl.pallas_call(
            simple_nn_kernel,
            out_shape=out_shape,
            in_specs=[
                pl.BlockSpec(memory_space=vmem),   # x
                pl.BlockSpec(memory_space=vmem),   # w1
                pl.BlockSpec(memory_space=vmem),   # b1
                pl.BlockSpec(memory_space=vmem),   # w2
                pl.BlockSpec(memory_space=smem),   # b2 scalar
            ],
            out_specs=pl.BlockSpec(memory_space=vmem),
            cost_estimate=cost,
        )(x, w1, b1, w2, b2)

    # Lane-dense (1, B) kernel output -> PyTorch (B, 1) layout.
    return out.reshape(B, 1)


def init_params(key, input_dim, hidden=64):
    """Deterministic init mimicking nn.Linear's U(-1/sqrt(fan_in), 1/sqrt(fan_in))."""
    k1, k2, k3, k4 = jax.random.split(key, 4)
    bound1 = 1.0 / jnp.sqrt(input_dim)
    bound2 = 1.0 / jnp.sqrt(hidden)
    w1 = jax.random.uniform(k1, (input_dim, hidden), jnp.float32, -bound1, bound1)
    b1 = jax.random.uniform(k2, (1, hidden), jnp.float32, -bound1, bound1)
    w2 = jax.random.uniform(k3, (1, hidden), jnp.float32, -bound2, bound2)
    b2 = jax.random.uniform(k4, (1, 1), jnp.float32, -bound2, bound2)
    return w1, b1, w2, b2


def _reference(x, w1, b1, w2, b2):
    # Pure-JAX reference with PyTorch semantics: sigmoid(relu(x@W1+b1)@W2.T + b2)
    return jax.nn.sigmoid(jnp.maximum(x @ w1 + b1, 0.0) @ w2.T + b2)


if __name__ == "__main__":
    key = jax.random.PRNGKey(0)
    k1, k2, k3, k4, k5, k6 = jax.random.split(key, 6)

    # --- Test 1: small batch, f32 exact path (no-grid, single VMEM blocks) --
    B1, D1 = 8, 256   # small stand-in for CountVectorizer(max_features=5000)
    x1 = jax.random.uniform(k1, (B1, D1), jnp.float32)
    raw1 = init_params(k2, D1)
    p1 = prepare_params(*raw1, matmul_dtype=jnp.float32)
    out1 = jax.block_until_ready(simple_nn_forward(x1, p1))
    ref1 = _reference(x1, *raw1)
    assert out1.shape == (B1, 1)
    assert jnp.allclose(out1, ref1, atol=1e-5, rtol=1e-5)

    # --- Test 2: ragged large batch + unaligned D, f32, cdiv-gridded path ---
    B2, D2 = 300, 200   # B % tile_m != 0 and D % 128 != 0 (no padding anywhere)
    x2 = jax.random.uniform(k3, (B2, D2), jnp.float32)
    raw2 = init_params(k4, D2)
    p2 = prepare_params(*raw2, matmul_dtype=jnp.float32)
    out2 = jax.block_until_ready(simple_nn_forward(x2, p2, tile_m=128))
    ref2 = _reference(x2, *raw2)
    assert out2.shape == (B2, 1)
    assert jnp.allclose(out2, ref2, atol=1e-5, rtol=1e-5)

    # --- Test 3: default bf16 operand streaming, gridded path ---------------
    B3, D3 = 256, 256
    x3 = jax.random.uniform(k5, (B3, D3), jnp.float32)
    raw3 = init_params(k6, D3)
    p3 = prepare_params(*raw3)                       # bf16 streaming by default
    out3 = jax.block_until_ready(simple_nn_forward(x3, p3, tile_m=128))
    ref3 = _reference(x3, *raw3)
    assert out3.shape == (B3, 1)
    assert jnp.allclose(out3, ref3, atol=2e-2, rtol=2e-2)

    print("KERNEL_OK")
</pallas_src>

<mosaic_0001>
module attributes {stable_mosaic.version = 11 : i64} {
  func.func @simple_nn_kernel(%arg0: memref<8x256xf32, #tpu.memory_space<vmem>>, %arg1: memref<256x64xf32, #tpu.memory_space<vmem>>, %arg2: memref<1x64xf32, #tpu.memory_space<vmem>>, %arg3: memref<1x64xf32, #tpu.memory_space<vmem>>, %arg4: memref<1x1xf32, #tpu.memory_space<smem>>, %arg5: memref<1x8xf32, #tpu.memory_space<vmem>>) attributes {dimension_semantics = [], scalar_prefetch = 0 : i64, scratch_operands = 0 : i64, tpu.core_type = #tpu.core_type<tc>} {
    %c0 = arith.constant 0 : index
    %c0_0 = arith.constant 0 : index
    %0 = vector.load %arg0[%c0, %c0_0] : memref<8x256xf32, #tpu.memory_space<vmem>>, vector<8x256xf32>
    %c0_1 = arith.constant 0 : index
    %c0_2 = arith.constant 0 : index
    %1 = vector.load %arg1[%c0_1, %c0_2] : memref<256x64xf32, #tpu.memory_space<vmem>>, vector<256x64xf32>
    %cst = arith.constant dense<0.000000e+00> : vector<8x64xf32>
    %2 = tpu.matmul %0, %1, %cst {dimension_numbers = #tpu.dot_dimension_numbers<[1], [0], [0], [1], [0, 0, 1, 1], [], []>} : vector<8x256xf32>, vector<256x64xf32>, vector<8x64xf32> -> vector<8x64xf32>
    %c0_3 = arith.constant 0 : index
    %c0_4 = arith.constant 0 : index
    %3 = vector.load %arg2[%c0_3, %c0_4] : memref<1x64xf32, #tpu.memory_space<vmem>>, vector<1x64xf32>
    %4 = vector.broadcast %3 : vector<1x64xf32> to vector<8x64xf32>
    %5 = arith.addf %2, %4 : vector<8x64xf32>
    %cst_5 = arith.constant 0.000000e+00 : f32
    %6 = vector.broadcast %cst_5 : f32 to vector<8x64xf32>
    %7 = arith.maximumf %5, %6 : vector<8x64xf32>
    %c0_6 = arith.constant 0 : index
    %c0_7 = arith.constant 0 : index
    %8 = vector.load %arg3[%c0_6, %c0_7] : memref<1x64xf32, #tpu.memory_space<vmem>>, vector<1x64xf32>
    %9 = vector.broadcast %8 : vector<1x64xf32> to vector<8x64xf32>
    %10 = arith.mulf %7, %9 : vector<8x64xf32>
    %cst_8 = arith.constant dense<0.000000e+00> : vector<8xf32>
    %11 = vector.multi_reduction <add>, %10, %cst_8 [1] : vector<8x64xf32> to vector<8xf32>
    %12 = vector.shape_cast %11 : vector<8xf32> to vector<8x1xf32>
    %c0_9 = arith.constant 0 : index
    %c0_10 = arith.constant 0 : index
    %13 = memref.load %arg4[%c0_9, %c0_10] : memref<1x1xf32, #tpu.memory_space<smem>>
    %14 = vector.broadcast %13 : f32 to vector<8x1xf32>
    %15 = arith.addf %12, %14 : vector<8x1xf32>
    %16 = arith.negf %15 : vector<8x1xf32>
    %17 = math.exp %16 : vector<8x1xf32>
    %cst_11 = arith.constant 1.000000e+00 : f32
    %18 = vector.broadcast %cst_11 : f32 to vector<8x1xf32>
    %19 = arith.addf %18, %17 : vector<8x1xf32>
    %20 = arith.divf %18, %19 : vector<8x1xf32>
    %21 = vector.shape_cast %20 : vector<8x1xf32> to vector<1x8xf32>
    %c0_12 = arith.constant 0 : index
    %c0_13 = arith.constant 0 : index
    %22 = vector.load %arg5[%c0_12, %c0_13] : memref<1x8xf32, #tpu.memory_space<vmem>>, vector<1x8xf32>
    tpu.vector_store %arg5[%c0_12, %c0_13], %21 {strides = array<i32>} : memref<1x8xf32, #tpu.memory_space<vmem>>, vector<1x8xf32>,
    return
  }
}

</mosaic_0001>

<llo_original>
// kernel: tpu_custom_call.1
$region0: #{tpu_custom_call.1}
  #allocation0 [shape = 'u32[]', space=smem, size = 0x4, offset = 0x4, fixed_abs, tag = 'smem constant byte address 0x4 - core index']
  #allocation1 [shape = 'u32[144,128]{1,0:T(1,128)}', space=vmem, size = 0x12000, scoped, tag = 'internal scratch']
  #allocation2 [shape = 'f32[1,1]{1,0:T(1,128)S(6)}', space=smem, size = 0x200, scoped, tag = 'scoped memory for tpu_custom_call.1']
  %s0 = inlined_call_operand.vmem [shape: f32[8,256], index: 0, kind: input, shape index: {}]
  %s1 = inlined_call_operand.vmem [shape: f32[256,64], index: 1, kind: input, shape index: {}]
  %s2 = inlined_call_operand.vmem [shape: f32[1,64], index: 2, kind: input, shape index: {}]
  %s3 = inlined_call_operand.vmem [shape: f32[1,64], index: 3, kind: input, shape index: {}]
  %s4 = inlined_call_operand.<no memory space> [shape: f32[1,1], index: 4, kind: input, shape index: {}]
  %s5 = inlined_call_operand.hbm [shape: f32[1,8], index: 5, kind: output, shape index: {}]
  %s6 = sld [smem:[#allocation0]]
  $region30: #{tpu_custom_call.1} parent=0
    _
  %s8 = ssub.s32 1, %s6
  %s9 = scalar_select 0, %s8, %s6
  %10 = sst [smem:[#allocation2]] %s4
  $region1: #{tpu_custom_call.1} parent=0
    #allocation3 [shape = 'u8[512]{0}', space=vmem, size = 0x400, scoped, tag = 'output window, operand 0, single buffered']
    #allocation4 [shape = 's32[1]{0}', space=sflag, size = 0x4, scoped, tag = 'scoped memory for tpu_custom_call.1']
    %11 = vsyncpa [#allocation4], 0
    // Predicated region
    $region2: #{tpu_custom_call.1} parent=1 // pred_check
      _
    $region3: #{tpu_custom_call.1} parent=1 // pred_check_branch
      %13 = sbr.rel (0) target = $region5
    $region4: #{tpu_custom_call.1} parent=1 // pred_region
      _
    $region5: #{tpu_custom_call.1} parent=1 // pred_fallthru
      _
    // Predicated region
    $region6: #{tpu_custom_call.1} parent=1 // pred_check
      _
    $region7: #{tpu_custom_call.1} parent=1 // pred_check_branch
      %15 = sbr.rel (0) target = $region9
    $region8: #{tpu_custom_call.1} parent=1 // pred_region
      _
    $region9: #{tpu_custom_call.1} parent=1 // pred_fallthru
      _
    // Predicated region
    $region10: #{tpu_custom_call.1} parent=1 // pred_check
      _
    $region11: #{tpu_custom_call.1} parent=1 // pred_check_branch
      %17 = sbr.rel (0) target = $region13
    $region12: #{tpu_custom_call.1} parent=1 // pred_region
      _
    $region13: #{tpu_custom_call.1} parent=1 // pred_fallthru
      _
    // Predicated region
    $region14: #{tpu_custom_call.1} parent=1 // pred_check
      _
    $region15: #{tpu_custom_call.1} parent=1 // pred_check_branch
      %19 = sbr.rel (0) target = $region17
    $region16: #{tpu_custom_call.1} parent=1 // pred_region
      _
    $region17: #{tpu_custom_call.1} parent=1 // pred_fallthru
      _
    // Predicated region
    $region18: #{tpu_custom_call.1} parent=1 // pred_check
      _
    $region19: #{tpu_custom_call.1} parent=1 // pred_check_branch
      %21 = sbr.rel (0) target = $region21
    $region20: #{tpu_custom_call.1} parent=1 // pred_region
      _
    $region21: #{tpu_custom_call.1} parent=1 // pred_fallthru
      _
    %v22 = vld [vmem:[%s0] sm:$0xff]
    %v23 = vld [vmem:[%s0 + $0x8] sm:$0xff]
    %v24 = vld [vmem:[%s1] sm:$0xff]
    %v25 = vld [vmem:[%s1 + $0x8] sm:$0xff]
    %v26 = vld [vmem:[%s1 + $0x10] sm:$0xff]
    %v27 = vld [vmem:[%s1 + $0x18] sm:$0xff]
    %v28 = vld [vmem:[%s1 + $0x20] sm:$0xff]
    %v29 = vld [vmem:[%s1 + $0x28] sm:$0xff]
    %v30 = vld [vmem:[%s1 + $0x30] sm:$0xff]
    %v31 = vld [vmem:[%s1 + $0x38] sm:$0xff]
    %v32 = vld [vmem:[%s1 + $0x40] sm:$0xff]
    %v33 = vld [vmem:[%s1 + $0x48] sm:$0xff]
    %v34 = vld [vmem:[%s1 + $0x50] sm:$0xff]
    %v35 = vld [vmem:[%s1 + $0x58] sm:$0xff]
    %v36 = vld [vmem:[%s1 + $0x60] sm:$0xff]
    %v37 = vld [vmem:[%s1 + $0x68] sm:$0xff]
    %v38 = vld [vmem:[%s1 + $0x70] sm:$0xff]
    %v39 = vld [vmem:[%s1 + $0x78] sm:$0xff]
    %v40 = vld [vmem:[%s1 + $0x80] sm:$0xff]
    %v41 = vld [vmem:[%s1 + $0x88] sm:$0xff]
    %v42 = vld [vmem:[%s1 + $0x90] sm:$0xff]
    %v43 = vld [vmem:[%s1 + $0x98] sm:$0xff]
    %v44 = vld [vmem:[%s1 + $0xa0] sm:$0xff]
    %v45 = vld [vmem:[%s1 + $0xa8] sm:$0xff]
    %v46 = vld [vmem:[%s1 + $0xb0] sm:$0xff]
    %v47 = vld [vmem:[%s1 + $0xb8] sm:$0xff]
    %v48 = vld [vmem:[%s1 + $0xc0] sm:$0xff]
    %v49 = vld [vmem:[%s1 + $0xc8] sm:$0xff]
    %v50 = vld [vmem:[%s1 + $0xd0] sm:$0xff]
    %v51 = vld [vmem:[%s1 + $0xd8] sm:$0xff]
    %v52 = vld [vmem:[%s1 + $0xe0] sm:$0xff]
    %v53 = vld [vmem:[%s1 + $0xe8] sm:$0xff]
    %v54 = vld [vmem:[%s1 + $0xf0] sm:$0xff]
    %v55 = vld [vmem:[%s1 + $0xf8] sm:$0xff]
    %v56 = vld [vmem:[%s2] sm:$0x1]
    %v58 = vlaneseq
    %v59 = vshrl.u32 %v58, 7
    %v60 = vsub.s32 0, %v59
    %v61 = vrot.slane %v56, %v60
    %63 = vmatprep.subr.mxu0 0.0
    %64 = vmatpush1.msra.mxu0 %v39
    %65 = vmatprep.subr.mxu0 0.0
    %66 = vmatpush1.msra.mxu0 %v38
    %67 = vmatprep.subr.mxu0 0.0
    %68 = vmatpush1.msra.mxu0 %v37
    %69 = vmatprep.subr.mxu0 0.0
    %70 = vmatpush1.msra.mxu0 %v36
    %71 = vmatprep.subr.mxu0 0.0
    %72 = vmatpush1.msra.mxu0 %v35
    %73 = vmatprep.subr.mxu0 0.0
    %74 = vmatpush1.msra.mxu0 %v34
    %75 = vmatprep.subr.mxu0 0.0
    %76 = vmatpush1.msra.mxu0 %v33
    %77 = vmatprep.subr.mxu0 0.0
    %78 = vmatpush1.msra.mxu0 %v32
    %79 = vmatprep.subr.mxu0 0.0
    %80 = vmatpush1.msra.mxu0 %v31
    %81 = vmatprep.subr.mxu0 0.0
    %82 = vmatpush1.msra.mxu0 %v30
    %83 = vmatprep.subr.mxu0 0.0
    %84 = vmatpush1.msra.mxu0 %v29
    %85 = vmatprep.subr.mxu0 0.0
    %86 = vmatpush1.msra.mxu0 %v28
    %87 = vmatprep.subr.mxu0 0.0
    %88 = vmatpush1.msra.mxu0 %v27
    %89 = vmatprep.subr.mxu0 0.0
    %90 = vmatpush1.msra.mxu0 %v26
    %91 = vmatprep.subr.mxu0 0.0
    %92 = vmatpush1.msra.mxu0 %v25
    %93 = vmatprep.subr.mxu0 0.0
    %94 = vmatpush1.msra.mxu0 %v24
    %95 = vmatprep.subr.mxu0 0.0
    %96 = vmatpush2.msra.mxu0 %v55
    %97 = vmatprep.subr.mxu0 0.0
    %98 = vmatpush2.msra.mxu0 %v54
    %99 = vmatprep.subr.mxu0 0.0
    %100 = vmatpush2.msra.mxu0 %v53
    %101 = vmatprep.subr.mxu0 0.0
    %102 = vmatpush2.msra.mxu0 %v52
    %103 = vmatprep.subr.mxu0 0.0
    %104 = vmatpush2.msra.mxu0 %v51
    %105 = vmatprep.subr.mxu0 0.0
    %106 = vmatpush2.msra.mxu0 %v50
    %107 = vmatprep.subr.mxu0 0.0
    %108 = vmatpush2.msra.mxu0 %v49
    %109 = vmatprep.subr.mxu0 0.0
    %110 = vmatpush2.msra.mxu0 %v48
    %111 = vmatprep.subr.mxu0 0.0
    %112 = vmatpush2.msra.mxu0 %v47
    %113 = vmatprep.subr.mxu0 0.0
    %114 = vmatpush2.msra.mxu0 %v46
    %115 = vmatprep.subr.mxu0 0.0
    %116 = vmatpush2.msra.mxu0 %v45
    %117 = vmatprep.subr.mxu0 0.0
    %118 = vmatpush2.msra.mxu0 %v44
    %119 = vmatprep.subr.mxu0 0.0
    %120 = vmatpush2.msra.mxu0 %v43
    %121 = vmatprep.subr.mxu0 0.0
    %122 = vmatpush2.msra.mxu0 %v42
    %123 = vmatprep.subr.mxu0 0.0
    %124 = vmatpush2.msra.mxu0 %v41
    %125 = vmatprep.subr.mxu0 0.0
    %126 = vmatpush2.msra.mxu0 %v40
    %127 = vmatprep.mubr.f32.mxu0 %v23
    %128 = vmatmul.mubr.f32.gmra.mxu0 %v22
    %v129 = vpop.f32.mrf.mxu0
    %v130 = vadd.f32 %v61, %v129
    %v131 = vpop.f32.mrf.mxu0
    %132 = vdwg.mxu0
    %v133 = vmax.f32 %v130, 0.0
    %v134 = vld [vmem:[%s3] sm:$0x1]
    %v136 = vlaneseq
    %v137 = vshrl.u32 %v136, 7
    %v138 = vsub.s32 0, %v137
    %v139 = vrot.slane %v134, %v138
    %v141 = vmul.f32 %v133, %v139
    %vm142 = vcmask 523264
    %v143 = vsel %vm142, %v141, 0.0
    %144 = vadd.xlane.f32.xlu0 %v143
    %v145 = vpop.xlane.xlu0 %144
    %s146 = sld [smem:[#allocation2]]
    %v147 = vstv %s146
    %v148 = vadd.f32 %v145, %v147
    %v149 = vxor.u32 %v148, 2147483648
    %v150 = vmul.f32 %v149, 1.442695
    %v151 = vpow.pop %v150
    %v152 = vadd.f32 %v151, 1.0
    %v153 = vrcp.pop %v152
    %v154 = vmul.f32 1.0, %v153
    %v156 = vlaneseq
    %v157 = vand.u32 %v156, 127
    %v158 = vlaneseq
    %v159 = vshrl.u32 %v158, 7
    %v160 = vsub.s32 %v157, %v159
    %v161 = vrot.slane %v154, %v160
    %vm163 = vcmask 57344
    %164 = vst.msk [vmem:[#allocation3] sm:$0x1] %vm163, %v161
    // Predicated region
    $region22: #{tpu_custom_call.1} parent=1 // pred_check
      _
    $region23: #{tpu_custom_call.1} parent=1 // pred_check_branch
      %166 = sbr.rel (0) target = $region25
    $region24: #{tpu_custom_call.1} parent=1 // pred_region
      %s168 = ssub.s32 16, 16
      %169 = vsyncadd [#allocation4], %s168
      %s171 = sshll.u32 [#allocation3], 4
      %s172 = int_to_ptr.vmem [resolvable:$true] %s171
      %174 = dma.vmem_to_hbm [thread:$0]  %s172, 16, %s5, [#allocation4]
    $region25: #{tpu_custom_call.1} parent=1 // pred_fallthru
      _
    // Predicated region
    $region26: #{tpu_custom_call.1} parent=1 // pred_check
      _
    $region27: #{tpu_custom_call.1} parent=1 // pred_check_branch
      %176 = sbr.rel (0) target = $region29
    $region28: #{tpu_custom_call.1} parent=1 // pred_region
      %177 = dma.done [#allocation4], 16
    $region29: #{tpu_custom_call.1} parent=1 // pred_fallthru
      _
    %178 = vsyncpa [#allocation4], 1

</llo_original>
